<compile_context>
chip_gen: v7x
topology: tpu7x:2x2x1
jax: 0.10.0
libtpu: 0.0.40
codegen_flags: <defaults>
</compile_context>

<pallas_src>
import jax
import jax.numpy as jnp
from jax.experimental import pallas as pl
from jax.experimental.pallas import tpu as pltpu


def _prefix_broadcast_kernel(src_ref, *out_refs):
    """One grid step == one batch tile, all layers.

    src_ref block : (L, 2, H*S*E)   head-major (key, value) prompt rows of the
                                    selected task (relayout done once in the
                                    wrapper on the tiny parameter).
    out_refs[l]   : (2, bt, H*S*E)  layer-l (key, value) rows for `bt` batch
                                    elements.  bt is a multiple of 8 (or == B)
                                    and the lane dim is H*S*E, so every store
                                    is an unmasked dense vst.
    """
    for l, o_ref in enumerate(out_refs):       # L is small & static: cheap unroll
        slab = src_ref[l]                      # (2, H*S*E)
        o_ref[...] = jnp.broadcast_to(
            slab[:, None, :], o_ref.shape).astype(o_ref.dtype)


def prefix_continual_mtl_encoder_fwd(prompts, task_id, *, batch_size,
                                     pre_seq_len, n_head, n_embd,
                                     out_dtype=None,
                                     target_block_bytes=8 * 1024 * 1024):
    """Pallas implementation of PrefixContinualMTLEncoder.forward
    (concat_prompts=False / task_identify_epi non-final path).

    Returns the same structure as the PyTorch module: a tuple of
    num_hidden_layers arrays, each (2, batch, n_head, pre_seq_len, n_embd).
    """
    T, L, two_s, D = prompts.shape
    S, H, E, B = pre_seq_len, n_head, n_embd, batch_size
    assert two_s == 2 * S and D == H * E
    HSE = H * S * E
    out_dtype = prompts.dtype if out_dtype is None else jnp.dtype(out_dtype)

    # 1) Select ONE task (dynamic_slice reads only that task's rows), then do
    #    the head split + (S,H)->(H,S) relayout once on the tiny selected
    #    parameter (B-times smaller than the output).  The kernel is then a
    #    pure lane-dense batch-replication copy.
    selected = jax.lax.dynamic_index_in_dim(prompts, task_id, axis=0,
                                            keepdims=False)          # (L, 2S, D)
    src = (selected.reshape(L, 2, S, H, E)
                   .transpose(0, 1, 3, 2, 4)
                   .reshape(L, 2, HSE))                              # (L, 2, H*S*E)

    # 2) Batch tile: the sublane dim of every output block must be a multiple
    #    of 8 (dense stores) or equal to B.  Size it so the per-step output
    #    (all L layers) stays near target_block_bytes for double buffering on
    #    every TPU generation (incl. v7x, 64 MiB VMEM).
    out_itemsize = jnp.dtype(out_dtype).itemsize
    per_b_bytes = L * 2 * HSE * out_itemsize
    if B * per_b_bytes <= target_block_bytes:
        bt = B
        if B >= 16 and B % 16 == 0:
            bt = B // 2        # >= 2 grid steps so both v7x TensorCores work
    else:
        bt = max(8, (target_block_bytes // per_b_bytes) // 8 * 8)
        bt = min(bt, B)        # bt > B only possible when B < 8; bt == B is legal
    nb = pl.cdiv(B, bt)        # ragged last tile (bt not dividing B) is masked

    step_out_bytes = L * 2 * bt * HSE * out_itemsize
    in_bytes = L * 2 * HSE * jnp.dtype(src.dtype).itemsize
    vmem_limit = int(min(48 << 20,
                         max(32 << 20, 2 * (step_out_bytes + in_bytes) + (4 << 20))))

    out = pl.pallas_call(
        _prefix_broadcast_kernel,
        out_shape=tuple(jax.ShapeDtypeStruct((2, B, HSE), out_dtype)
                        for _ in range(L)),
        grid=(nb,),
        in_specs=[pl.BlockSpec((L, 2, HSE), lambda b: (0, 0, 0))],
        out_specs=tuple(pl.BlockSpec((2, bt, HSE), lambda b: (0, b, 0))
                        for _ in range(L)),
        compiler_params=pltpu.CompilerParams(
            dimension_semantics=("parallel",),
            vmem_limit_bytes=vmem_limit),
    )(src)

    # 3) Metadata-only reshape: split the lane-dense H*S*E back into (H, S, E).
    #    (The expensive relayout already happened on the tiny input side.)
    return tuple(o.reshape(2, B, H, S, E) for o in out)


def _reference_fwd(prompts, task_id, *, batch_size, pre_seq_len, n_head, n_embd):
    """Pure-JAX reference mirroring the PyTorch forward (default path)."""
    T, L, two_s, D = prompts.shape
    S, H, E, B = pre_seq_len, n_head, n_embd, batch_size
    P = prompts[task_id]                                    # (L, 2S, H*E)
    Pk = P[:, :S, :].reshape(L, S, H, E)
    Pv = P[:, S:, :].reshape(L, S, H, E)
    Pk_ = jnp.broadcast_to(Pk[:, None], (L, B, S, H, E)).transpose(0, 1, 3, 2, 4)
    Pv_ = jnp.broadcast_to(Pv[:, None], (L, B, S, H, E)).transpose(0, 1, 3, 2, 4)
    return tuple(jnp.stack([Pk_[l], Pv_[l]], axis=0) for l in range(L))


if __name__ == "__main__":
    # Small config consistent with the module's __init__:
    #   num_tasks=2, num_hidden_layers=4, num_attention_heads=4,
    #   hidden_size=32 -> n_embd=8, pre_seq_len=8, batch_size=2.
    num_tasks, num_layers, n_head, hidden, pre_seq_len, batch = 2, 4, 4, 32, 8, 2
    n_embd = hidden // n_head

    # Deterministic synthetic parameter init (stands in for nn.init.orthogonal_).
    # TODO(synk): exact torch orthogonal_ init not reproduced; synthetic normal used.
    key = jax.random.PRNGKey(0)
    prompts = jax.random.normal(
        key, (num_tasks, num_layers, pre_seq_len * 2, n_head * n_embd), jnp.float32)

    task_id = 1
    pkv = prefix_continual_mtl_encoder_fwd(
        prompts, task_id, batch_size=batch,
        pre_seq_len=pre_seq_len, n_head=n_head, n_embd=n_embd)
    pkv = jax.block_until_ready(pkv)

    ref = _reference_fwd(
        prompts, task_id, batch_size=batch,
        pre_seq_len=pre_seq_len, n_head=n_head, n_embd=n_embd)

    for a, b in zip(pkv, ref):
        assert a.shape == (2, batch, n_head, pre_seq_len, n_embd)
        assert a.dtype == prompts.dtype
        assert jnp.allclose(a, b), "mismatch vs reference"

    # Optional in-kernel bf16 downcast path (halves HBM writeback when the
    # consumer accepts bf16).
    pkv_bf16 = prefix_continual_mtl_encoder_fwd(
        prompts, task_id, batch_size=batch,
        pre_seq_len=pre_seq_len, n_head=n_head, n_embd=n_embd,
        out_dtype=jnp.bfloat16)
    pkv_bf16 = jax.block_until_ready(pkv_bf16)
    for a, b in zip(pkv_bf16, ref):
        assert a.dtype == jnp.bfloat16
        assert jnp.allclose(a.astype(jnp.float32), b, rtol=1e-2, atol=1e-2)

    print("KERNEL_OK")
</pallas_src>

<mosaic_0001>
module attributes {stable_mosaic.version = 11 : i64} {
  func.func @_prefix_broadcast_kernel(%arg0: i32, %arg1: memref<4x2x256xf32, #tpu.memory_space<vmem>>, %arg2: memref<2x2x256xf32, #tpu.memory_space<vmem>>, %arg3: memref<2x2x256xf32, #tpu.memory_space<vmem>>, %arg4: memref<2x2x256xf32, #tpu.memory_space<vmem>>, %arg5: memref<2x2x256xf32, #tpu.memory_space<vmem>>) attributes {dimension_semantics = [#tpu.dimension_semantics<parallel>], iteration_bounds = array<i64: 1>, scalar_prefetch = 0 : i64, scratch_operands = 0 : i64, tpu.core_type = #tpu.core_type<tc>, window_params = [{pipeline_mode = #tpu.pipeline_mode<synchronous>, transform_indices = @transform_0, window_bounds = array<i64: 4, 2, 256>}, {transform_indices = @transform_1, window_bounds = array<i64: 2, 2, 256>}, {transform_indices = @transform_2, window_bounds = array<i64: 2, 2, 256>}, {transform_indices = @transform_3, window_bounds = array<i64: 2, 2, 256>}, {transform_indices = @transform_4, window_bounds = array<i64: 2, 2, 256>}]} {
    %c0 = arith.constant 0 : index
    %c0_0 = arith.constant 0 : index
    %c0_1 = arith.constant 0 : index
    %0 = vector.load %arg1[%c0, %c0_0, %c0_1] : memref<4x2x256xf32, #tpu.memory_space<vmem>>, vector<1x2x256xf32>
    %1 = vector.shape_cast %0 : vector<1x2x256xf32> to vector<2x256xf32>
    %2 = vector.shape_cast %1 : vector<2x256xf32> to vector<2x1x256xf32>
    %3 = vector.shape_cast %2 : vector<2x1x256xf32> to vector<2x1x256xf32>
    %4 = vector.broadcast %3 : vector<2x1x256xf32> to vector<2x2x256xf32>
    %c0_2 = arith.constant 0 : index
    %c0_3 = arith.constant 0 : index
    %c0_4 = arith.constant 0 : index
    %5 = vector.load %arg2[%c0_2, %c0_3, %c0_4] : memref<2x2x256xf32, #tpu.memory_space<vmem>>, vector<2x2x256xf32>
    tpu.vector_store %arg2[%c0_2, %c0_3, %c0_4], %4 {strides = array<i32>} : memref<2x2x256xf32, #tpu.memory_space<vmem>>, vector<2x2x256xf32>,
    %c1 = arith.constant 1 : index
    %c0_5 = arith.constant 0 : index
    %c0_6 = arith.constant 0 : index
    %6 = vector.load %arg1[%c1, %c0_5, %c0_6] : memref<4x2x256xf32, #tpu.memory_space<vmem>>, vector<1x2x256xf32>
    %7 = vector.shape_cast %6 : vector<1x2x256xf32> to vector<2x256xf32>
    %8 = vector.shape_cast %7 : vector<2x256xf32> to vector<2x1x256xf32>
    %9 = vector.shape_cast %8 : vector<2x1x256xf32> to vector<2x1x256xf32>
    %10 = vector.broadcast %9 : vector<2x1x256xf32> to vector<2x2x256xf32>
    %c0_7 = arith.constant 0 : index
    %c0_8 = arith.constant 0 : index
    %c0_9 = arith.constant 0 : index
    %11 = vector.load %arg3[%c0_7, %c0_8, %c0_9] : memref<2x2x256xf32, #tpu.memory_space<vmem>>, vector<2x2x256xf32>
    tpu.vector_store %arg3[%c0_7, %c0_8, %c0_9], %10 {strides = array<i32>} : memref<2x2x256xf32, #tpu.memory_space<vmem>>, vector<2x2x256xf32>,
    %c2 = arith.constant 2 : index
    %c0_10 = arith.constant 0 : index
    %c0_11 = arith.constant 0 : index
    %12 = vector.load %arg1[%c2, %c0_10, %c0_11] : memref<4x2x256xf32, #tpu.memory_space<vmem>>, vector<1x2x256xf32>
    %13 = vector.shape_cast %12 : vector<1x2x256xf32> to vector<2x256xf32>
    %14 = vector.shape_cast %13 : vector<2x256xf32> to vector<2x1x256xf32>
    %15 = vector.shape_cast %14 : vector<2x1x256xf32> to vector<2x1x256xf32>
    %16 = vector.broadcast %15 : vector<2x1x256xf32> to vector<2x2x256xf32>
    %c0_12 = arith.constant 0 : index
    %c0_13 = arith.constant 0 : index
    %c0_14 = arith.constant 0 : index
    %17 = vector.load %arg4[%c0_12, %c0_13, %c0_14] : memref<2x2x256xf32, #tpu.memory_space<vmem>>, vector<2x2x256xf32>
    tpu.vector_store %arg4[%c0_12, %c0_13, %c0_14], %16 {strides = array<i32>} : memref<2x2x256xf32, #tpu.memory_space<vmem>>, vector<2x2x256xf32>,
    %c3 = arith.constant 3 : index
    %c0_15 = arith.constant 0 : index
    %c0_16 = arith.constant 0 : index
    %18 = vector.load %arg1[%c3, %c0_15, %c0_16] : memref<4x2x256xf32, #tpu.memory_space<vmem>>, vector<1x2x256xf32>
    %19 = vector.shape_cast %18 : vector<1x2x256xf32> to vector<2x256xf32>
    %20 = vector.shape_cast %19 : vector<2x256xf32> to vector<2x1x256xf32>
    %21 = vector.shape_cast %20 : vector<2x1x256xf32> to vector<2x1x256xf32>
    %22 = vector.broadcast %21 : vector<2x1x256xf32> to vector<2x2x256xf32>
    %c0_17 = arith.constant 0 : index
    %c0_18 = arith.constant 0 : index
    %c0_19 = arith.constant 0 : index
    %23 = vector.load %arg5[%c0_17, %c0_18, %c0_19] : memref<2x2x256xf32, #tpu.memory_space<vmem>>, vector<2x2x256xf32>
    tpu.vector_store %arg5[%c0_17, %c0_18, %c0_19], %22 {strides = array<i32>} : memref<2x2x256xf32, #tpu.memory_space<vmem>>, vector<2x2x256xf32>,
    return
  }
  func.func @transform_0(%arg0: i32) -> (i32, i32, i32) {
    %c0_i32 = arith.constant 0 : i32
    %c0_i32_0 = arith.constant 0 : i32
    %c0_i32_1 = arith.constant 0 : i32
    %c0_i32_2 = arith.constant 0 : i32
    return %c0_i32, %c0_i32_0, %c0_i32_1 : i32, i32, i32
  }
  func.func @transform_1(%arg0: i32) -> (i32, i32, i32) {
    %c0_i32 = arith.constant 0 : i32
    %c0_i32_0 = arith.constant 0 : i32
    %c0_i32_1 = arith.constant 0 : i32
    return %c0_i32, %arg0, %c0_i32_0 : i32, i32, i32
  }
  func.func @transform_2(%arg0: i32) -> (i32, i32, i32) {
    %c0_i32 = arith.constant 0 : i32
    %c0_i32_0 = arith.constant 0 : i32
    %c0_i32_1 = arith.constant 0 : i32
    return %c0_i32, %arg0, %c0_i32_0 : i32, i32, i32
  }
  func.func @transform_3(%arg0: i32) -> (i32, i32, i32) {
    %c0_i32 = arith.constant 0 : i32
    %c0_i32_0 = arith.constant 0 : i32
    %c0_i32_1 = arith.constant 0 : i32
    return %c0_i32, %arg0, %c0_i32_0 : i32, i32, i32
  }
  func.func @transform_4(%arg0: i32) -> (i32, i32, i32) {
    %c0_i32 = arith.constant 0 : i32
    %c0_i32_0 = arith.constant 0 : i32
    %c0_i32_1 = arith.constant 0 : i32
    return %c0_i32, %arg0, %c0_i32_0 : i32, i32, i32
  }
}

</mosaic_0001>

<llo_original>
// kernel: tpu_custom_call.1
$region0: #{tpu_custom_call.1}
  #allocation0 [shape = 'u32[]', space=smem, size = 0x4, offset = 0x4, fixed_abs, tag = 'smem constant byte address 0x4 - core index']
  #allocation1 [shape = 'u32[144,128]{1,0:T(1,128)}', space=vmem, size = 0x12000, scoped, tag = 'internal scratch']
  %s0 = inlined_call_operand.hbm [shape: f32[4,2,256], index: 0, kind: input, shape index: {}]
  %s1 = inlined_call_operand.hbm [shape: f32[2,2,256], index: 1, kind: output, shape index: {0}]
  %s2 = inlined_call_operand.hbm [shape: f32[2,2,256], index: 2, kind: output, shape index: {1}]
  %s3 = inlined_call_operand.hbm [shape: f32[2,2,256], index: 3, kind: output, shape index: {2}]
  %s4 = inlined_call_operand.hbm [shape: f32[2,2,256], index: 4, kind: output, shape index: {3}]
  %5 = xla_tuple %s1, %s2, %s3, %s4
  %s6 = sld [smem:[#allocation0]]
  $region42: #{tpu_custom_call.1} parent=0
    _
  %s8 = ssub.s32 1, %s6
  %s9 = scalar_select 0, %s8, %s6
  $region1: #{tpu_custom_call.1} parent=0
    #allocation2 [shape = 'u8[8192]{0}', space=vmem, size = 0x2000, scoped, tag = 'input window, operand 0, single buffered']
    #allocation3 [shape = 's32[1]{0}', space=sflag, size = 0x4, scoped, tag = 'scoped memory for tpu_custom_call.1']
    #allocation4 [shape = 's32[1]{0}', space=sflag, size = 0x4, scoped, tag = 'scoped memory for tpu_custom_call.1']
    #allocation5 [shape = 'u8[4096]{0}', space=vmem, size = 0x1000, scoped, tag = 'output window, operand 0, single buffered']
    #allocation6 [shape = 'u8[4096]{0}', space=vmem, size = 0x1000, scoped, tag = 'output window, operand 1, single buffered']
    #allocation7 [shape = 's32[1]{0}', space=sflag, size = 0x4, scoped, tag = 'scoped memory for tpu_custom_call.1']
    #allocation8 [shape = 'u8[4096]{0}', space=vmem, size = 0x1000, scoped, tag = 'output window, operand 2, single buffered']
    #allocation9 [shape = 'u8[4096]{0}', space=vmem, size = 0x1000, scoped, tag = 'output window, operand 3, single buffered']
    #allocation10 [shape = 's32[1]{0}', space=sflag, size = 0x4, scoped, tag = 'scoped memory for tpu_custom_call.1']
    %10 = vsyncpa [#allocation3], 0
    %11 = vsyncpa [#allocation4], 0
    %12 = vsyncpa [#allocation7], 0
    %13 = vsyncpa [#allocation10], 0
    // Predicated region
    $region2: #{tpu_custom_call.1} parent=1 // pred_check
      _
    $region3: #{tpu_custom_call.1} parent=1 // pred_check_branch
      %15 = sbr.rel (0) target = $region5
    $region4: #{tpu_custom_call.1} parent=1 // pred_region
      %s17 = ssub.s32 256, 256
      %18 = vsyncadd [#allocation3], %s17
      %s19 = sshll.u32 [#allocation2], 4
      %s20 = int_to_ptr.vmem [resolvable:$true] %s19
      %25 = dma.hbm_to_vmem [thread:$0]  %s0, 256, %s20, [#allocation3], 64, 64, 4
    $region5: #{tpu_custom_call.1} parent=1 // pred_fallthru
      _
    // Predicated region
    $region6: #{tpu_custom_call.1} parent=1 // pred_check
      _
    $region7: #{tpu_custom_call.1} parent=1 // pred_check_branch
      %27 = sbr.rel (0) target = $region9
    $region8: #{tpu_custom_call.1} parent=1 // pred_region
      %28 = dma.done [#allocation3], 256
    $region9: #{tpu_custom_call.1} parent=1 // pred_fallthru
      _
    %v29 = vld [vmem:[#allocation2] sm:$0xf]
    %v32 = vunpack.c.l.s4 1966171168
    %v33 = vunpack.c.0.s8 %v32
    %v34 = vlaneseq
    %v35 = vshrl.u32 %v34, 7
    %v36 = vsub.s32 %v33, %v35
    %v37 = vrot.slane %v29, %v36
    %v38 = vcombine.high %v37, %v37
    %v39 = vlaneseq
    %v40 = vshrl.u32 %v39, 7
    %v41 = vsub.s32 0, %v40
    %v42 = vrot.slane %v37, %v41
    %v43 = vlaneseq
    %v44 = vshrl.u32 %v43, 7
    %v45 = vsub.s32 1, %v44
    %v46 = vrot.slane %v37, %v45
    %v47 = vlaneseq
    %v48 = vshrl.u32 %v47, 7
    %v49 = vsub.s32 0, %v48
    %v50 = vrot.slane %v38, %v49
    %v51 = vlaneseq
    %v52 = vshrl.u32 %v51, 7
    %v53 = vsub.s32 1, %v52
    %v54 = vrot.slane %v38, %v53
    %v55 = vcombine.low %v42, %v46
    %v57 = vunpack.c.l.s4 1983009808
    %v58 = vunpack.c.0.s8 %v57
    %v59 = vlaneseq
    %v60 = vshrl.u32 %v59, 7
    %v61 = vsub.s32 %v58, %v60
    %v62 = vrot.slane %v55, %v61
    %v63 = vcombine.low %v50, %v54
    %v65 = vunpack.c.l.s4 1983009808
    %v66 = vunpack.c.0.s8 %v65
    %v67 = vlaneseq
    %v68 = vshrl.u32 %v67, 7
    %v69 = vsub.s32 %v66, %v68
    %v70 = vrot.slane %v63, %v69
    %73 = vst [vmem:[#allocation5] sm:$0xf] %v62
    %74 = vst [vmem:[#allocation5 + $0x4] sm:$0xf] %v70
    %s75 = scalar_lea.vmem [#allocation2], 4
    %v76 = vld [vmem:[%s75] sm:$0xf]
    %v79 = vunpack.c.l.s4 1966171168
    %v80 = vunpack.c.0.s8 %v79
    %v81 = vlaneseq
    %v82 = vshrl.u32 %v81, 7
    %v83 = vsub.s32 %v80, %v82
    %v84 = vrot.slane %v76, %v83
    %v85 = vcombine.high %v84, %v84
    %v86 = vlaneseq
    %v87 = vshrl.u32 %v86, 7
    %v88 = vsub.s32 0, %v87
    %v89 = vrot.slane %v84, %v88
    %v90 = vlaneseq
    %v91 = vshrl.u32 %v90, 7
    %v92 = vsub.s32 1, %v91
    %v93 = vrot.slane %v84, %v92
    %v94 = vlaneseq
    %v95 = vshrl.u32 %v94, 7
    %v96 = vsub.s32 0, %v95
    %v97 = vrot.slane %v85, %v96
    %v98 = vlaneseq
    %v99 = vshrl.u32 %v98, 7
    %v100 = vsub.s32 1, %v99
    %v101 = vrot.slane %v85, %v100
    %v102 = vcombine.low %v89, %v93
    %v104 = vunpack.c.l.s4 1983009808
    %v105 = vunpack.c.0.s8 %v104
    %v106 = vlaneseq
    %v107 = vshrl.u32 %v106, 7
    %v108 = vsub.s32 %v105, %v107
    %v109 = vrot.slane %v102, %v108
    %v110 = vcombine.low %v97, %v101
    %v112 = vunpack.c.l.s4 1983009808
    %v113 = vunpack.c.0.s8 %v112
    %v114 = vlaneseq
    %v115 = vshrl.u32 %v114, 7
    %v116 = vsub.s32 %v113, %v115
    %v117 = vrot.slane %v110, %v116
    %120 = vst [vmem:[#allocation6] sm:$0xf] %v109
    %121 = vst [vmem:[#allocation6 + $0x4] sm:$0xf] %v117
    %s122 = scalar_lea.vmem [#allocation2], 8
    %v123 = vld [vmem:[%s122] sm:$0xf]
    %v126 = vunpack.c.l.s4 1966171168
    %v127 = vunpack.c.0.s8 %v126
    %v128 = vlaneseq
    %v129 = vshrl.u32 %v128, 7
    %v130 = vsub.s32 %v127, %v129
    %v131 = vrot.slane %v123, %v130
    %v132 = vcombine.high %v131, %v131
    %v133 = vlaneseq
    %v134 = vshrl.u32 %v133, 7
    %v135 = vsub.s32 0, %v134
    %v136 = vrot.slane %v131, %v135
    %v137 = vlaneseq
    %v138 = vshrl.u32 %v137, 7
    %v139 = vsub.s32 1, %v138
    %v140 = vrot.slane %v131, %v139
    %v141 = vlaneseq
    %v142 = vshrl.u32 %v141, 7
    %v143 = vsub.s32 0, %v142
    %v144 = vrot.slane %v132, %v143
    %v145 = vlaneseq
    %v146 = vshrl.u32 %v145, 7
    %v147 = vsub.s32 1, %v146
    %v148 = vrot.slane %v132, %v147
    %v149 = vcombine.low %v136, %v140
    %v151 = vunpack.c.l.s4 1983009808
    %v152 = vunpack.c.0.s8 %v151
    %v153 = vlaneseq
    %v154 = vshrl.u32 %v153, 7
    %v155 = vsub.s32 %v152, %v154
    %v156 = vrot.slane %v149, %v155
    %v157 = vcombine.low %v144, %v148
    %v159 = vunpack.c.l.s4 1983009808
    %v160 = vunpack.c.0.s8 %v159
    %v161 = vlaneseq
    %v162 = vshrl.u32 %v161, 7
    %v163 = vsub.s32 %v160, %v162
    %v164 = vrot.slane %v157, %v163
    %167 = vst [vmem:[#allocation8] sm:$0xf] %v156
    %168 = vst [vmem:[#allocation8 + $0x4] sm:$0xf] %v164
    %s169 = scalar_lea.vmem [#allocation2], 12
    %v170 = vld [vmem:[%s169] sm:$0xf]
    %v173 = vunpack.c.l.s4 1966171168
    %v174 = vunpack.c.0.s8 %v173
    %v175 = vlaneseq
    %v176 = vshrl.u32 %v175, 7
    %v177 = vsub.s32 %v174, %v176
    %v178 = vrot.slane %v170, %v177
    %v179 = vcombine.high %v178, %v178
    %v180 = vlaneseq
    %v181 = vshrl.u32 %v180, 7
    %v182 = vsub.s32 0, %v181
    %v183 = vrot.slane %v178, %v182
    %v184 = vlaneseq
    %v185 = vshrl.u32 %v184, 7
    %v186 = vsub.s32 1, %v185
    %v187 = vrot.slane %v178, %v186
    %v188 = vlaneseq
    %v189 = vshrl.u32 %v188, 7
    %v190 = vsub.s32 0, %v189
    %v191 = vrot.slane %v179, %v190
    %v192 = vlaneseq
    %v193 = vshrl.u32 %v192, 7
    %v194 = vsub.s32 1, %v193
    %v195 = vrot.slane %v179, %v194
    %v196 = vcombine.low %v183, %v187
    %v198 = vunpack.c.l.s4 1983009808
    %v199 = vunpack.c.0.s8 %v198
    %v200 = vlaneseq
    %v201 = vshrl.u32 %v200, 7
    %v202 = vsub.s32 %v199, %v201
    %v203 = vrot.slane %v196, %v202
    %v204 = vcombine.low %v191, %v195
    %v206 = vunpack.c.l.s4 1983009808
    %v207 = vunpack.c.0.s8 %v206
    %v208 = vlaneseq
    %v209 = vshrl.u32 %v208, 7
    %v210 = vsub.s32 %v207, %v209
    %v211 = vrot.slane %v204, %v210
    %214 = vst [vmem:[#allocation9] sm:$0xf] %v203
    %215 = vst [vmem:[#allocation9 + $0x4] sm:$0xf] %v211
    // Predicated region
    $region10: #{tpu_custom_call.1} parent=1 // pred_check
      _
    $region11: #{tpu_custom_call.1} parent=1 // pred_check_branch
      %217 = sbr.rel (0) target = $region13
    $region12: #{tpu_custom_call.1} parent=1 // pred_region
      %s219 = ssub.s32 128, 128
      %220 = vsyncadd [#allocation4], %s219
      %s221 = sshll.u32 [#allocation5], 4
      %s222 = int_to_ptr.vmem [resolvable:$true] %s221
      %227 = dma.vmem_to_hbm [thread:$0]  %s222, 128, %s1, [#allocation4], 64, 64, 4
    $region13: #{tpu_custom_call.1} parent=1 // pred_fallthru
      _
    // Predicated region
    $region14: #{tpu_custom_call.1} parent=1 // pred_check
      _
    $region15: #{tpu_custom_call.1} parent=1 // pred_check_branch
      %229 = sbr.rel (0) target = $region17
    $region16: #{tpu_custom_call.1} parent=1 // pred_region
      %s231 = ssub.s32 128, 128
      %232 = vsyncadd [#allocation7], %s231
      %s233 = sshll.u32 [#allocation6], 4
      %s234 = int_to_ptr.vmem [resolvable:$true] %s233
      %239 = dma.vmem_to_hbm [thread:$0]  %s234, 128, %s2, [#allocation7], 64, 64, 4
    $region17: #{tpu_custom_call.1} parent=1 // pred_fallthru
      _
    // Predicated region
    $region18: #{tpu_custom_call.1} parent=1 // pred_check
      _
    $region19: #{tpu_custom_call.1} parent=1 // pred_check_branch
      %241 = sbr.rel (0) target = $region21
    $region20: #{tpu_custom_call.1} parent=1 // pred_region
      %s243 = ssub.s32 128, 128
      %244 = vsyncadd [#allocation7], %s243
      %s245 = sshll.u32 [#allocation8], 4
      %s246 = int_to_ptr.vmem [resolvable:$true] %s245
      %251 = dma.vmem_to_hbm [thread:$0]  %s246, 128, %s3, [#allocation7], 64, 64, 4
    $region21: #{tpu_custom_call.1} parent=1 // pred_fallthru
      _
    // Predicated region
    $region22: #{tpu_custom_call.1} parent=1 // pred_check
      _
    $region23: #{tpu_custom_call.1} parent=1 // pred_check_branch
      %253 = sbr.rel (0) target = $region25
    $region24: #{tpu_custom_call.1} parent=1 // pred_region
      %s255 = ssub.s32 128, 128
      %256 = vsyncadd [#allocation10], %s255
      %s257 = sshll.u32 [#allocation9], 4
      %s258 = int_to_ptr.vmem [resolvable:$true] %s257
      %263 = dma.vmem_to_hbm [thread:$0]  %s258, 128, %s4, [#allocation10], 64, 64, 4
    $region25: #{tpu_custom_call.1} parent=1 // pred_fallthru
      _
    // Predicated region
    $region26: #{tpu_custom_call.1} parent=1 // pred_check
      _
    $region27: #{tpu_custom_call.1} parent=1 // pred_check_branch
      %265 = sbr.rel (0) target = $region29
    $region28: #{tpu_custom_call.1} parent=1 // pred_region
      %266 = dma.done [#allocation4], 128
    $region29: #{tpu_custom_call.1} parent=1 // pred_fallthru
      _
    // Predicated region
    $region30: #{tpu_custom_call.1} parent=1 // pred_check
      _
    $region31: #{tpu_custom_call.1} parent=1 // pred_check_branch
      %268 = sbr.rel (0) target = $region33
    $region32: #{tpu_custom_call.1} parent=1 // pred_region
      %269 = dma.done [#allocation7], 128
    $region33: #{tpu_custom_call.1} parent=1 // pred_fallthru
      _
    // Predicated region
    $region34: #{tpu_custom_call.1} parent=1 // pred_check
      _
    $region35: #{tpu_custom_call.1} parent=1 // pred_check_branch
      %271 = sbr.rel (0) target = $region37
    $region36: #{tpu_custom_call.1} parent=1 // pred_region
      %272 = dma.done [#allocation7], 128
    $region37: #{tpu_custom_call.1} parent=1 // pred_fallthru
      _
    // Predicated region
    $region38: #{tpu_custom_call.1} parent=1 // pred_check
      _
    $region39: #{tpu_custom_call.1} parent=1 // pred_check_branch
      %274 = sbr.rel (0) target = $region41
    $region40: #{tpu_custom_call.1} parent=1 // pred_region
      %275 = dma.done [#allocation10], 128
    $region41: #{tpu_custom_call.1} parent=1 // pred_fallthru
      _
    %276 = vsyncpa [#allocation3], 1
    %277 = vsyncpa [#allocation4], 1
    %278 = vsyncpa [#allocation7], 1
    %279 = vsyncpa [#allocation10], 1

</llo_original>
